<compile_context>
chip_gen: v6e
topology: v6e:2x2x1
jax: 0.10.0
libtpu: 0.0.40
codegen_flags: <defaults>
</compile_context>

<pallas_src>
import functools

import jax
import jax.numpy as jnp
import numpy as np
from jax.experimental import pallas as pl
from jax.experimental.pallas import tpu as pltpu


def _round_up(x: int, m: int) -> int:
    return ((x + m - 1) // m) * m


def _pick_tiles(m: int, k: int, n: int):
    """Largest aligned tiles up to (256, 512, 512) that the problem allows."""
    tm = min(256, _round_up(m, 8))      # sublane-aligned rows of the operator / output
    tk = min(512, _round_up(k, 128))    # lane-dense contraction dim
    tn = min(512, _round_up(n, 128))    # lane-dense output channels
    return tm, tk, tn


def _pool_matmul_kernel(p_ref, x_ref, o_ref, acc_ref):
    """Tiled out = P @ x with f32 accumulation over the K grid axis."""
    @pl.when(pl.program_id(2) == 0)
    def _init():
        acc_ref[...] = jnp.zeros_like(acc_ref)

    acc_ref[...] += jnp.dot(p_ref[...], x_ref[...],
                            preferred_element_type=jnp.float32)

    @pl.when(pl.program_id(2) == pl.num_programs(2) - 1)
    def _store():
        o_ref[...] = acc_ref[...].astype(o_ref.dtype)


@functools.partial(jax.jit, static_argnames=("tm", "tn", "tk"))
def _pool_matmul(p, x, *, tm, tn, tk):
    m_pad, k_pad = p.shape
    k_pad2, c_pad = x.shape
    assert k_pad == k_pad2
    grid = (m_pad // tm, c_pad // tn, k_pad // tk)

    # Double-buffered input tiles + double-buffered output tile + accumulator,
    # plus headroom; clamp into [16 MiB, 64 MiB] so it is valid on every chip.
    itemsize = jnp.dtype(x.dtype).itemsize
    vmem_bytes = (2 * tm * tk * jnp.dtype(p.dtype).itemsize
                  + 2 * tk * tn * itemsize
                  + 2 * tm * tn * itemsize
                  + tm * tn * 4
                  + (2 << 20))
    vmem_bytes = int(min(max(vmem_bytes, 16 << 20), 64 << 20))

    return pl.pallas_call(
        _pool_matmul_kernel,
        out_shape=jax.ShapeDtypeStruct((m_pad, c_pad), x.dtype),
        grid_spec=pltpu.PrefetchScalarGridSpec(
            num_scalar_prefetch=0,
            grid=grid,
            in_specs=[
                pl.BlockSpec((tm, tk), lambda i, j, k: (i, k)),   # operator tile
                pl.BlockSpec((tk, tn), lambda i, j, k: (k, j)),   # feature tile
            ],
            out_specs=pl.BlockSpec((tm, tn), lambda i, j, k: (i, j)),
            scratch_shapes=[pltpu.VMEM((tm, tn), jnp.float32)],
        ),
        compiler_params=pltpu.CompilerParams(
            dimension_semantics=("parallel", "parallel", "arbitrary"),
            vmem_limit_bytes=vmem_bytes,
        ),
    )(p, x)


def build_pool_operator(edge_index, edge_attr, n_coarse, n_fine, dtype, tm, tk):
    """Densify the (static) weighted pooling operator, padded to tile multiples.

    P[dst, src] += w  so that  out = P @ x  is the weighted scatter-add.
    Built once per graph (hoisted out of the forward pass) and reused.
    """
    src = edge_index[0]
    dst = edge_index[1]
    w = edge_attr.reshape(-1).astype(dtype)
    m_pad = _round_up(n_coarse, tm)
    k_pad = _round_up(n_fine, tk)
    return jnp.zeros((m_pad, k_pad), dtype=dtype).at[dst, src].add(w)


def custom_pooling_add(x, edge_index, edge_attr, pool_data_forward, *, p_dense=None):
    """Weighted add-pooling of fine-node features onto coarse nodes.

    x:                 [N_fine, C]   float32 fine-node features
    edge_index:        [2, E] int32  row 0 = fine src node, row 1 = coarse dst node
    edge_attr:         [E] or [E,1]  float32 pooling weights
    pool_data_forward: [N_coarse]    coarse-side pooling metadata (used here only
                                     to recover N_coarse, the output row count)
    p_dense:           optional precomputed padded operator (from build_pool_operator)
    returns:           [N_coarse, C]
    """
    n_fine, c = x.shape
    n_coarse = pool_data_forward.shape[0]
    tm, tk, tn = _pick_tiles(n_coarse, n_fine, c)

    if p_dense is None:
        p_dense = build_pool_operator(edge_index, edge_attr, n_coarse, n_fine,
                                      x.dtype, tm, tk)

    k_pad = _round_up(n_fine, tk)
    c_pad = _round_up(c, tn)
    x_pad = jnp.pad(x, ((0, k_pad - n_fine), (0, c_pad - c)))

    out_pad = _pool_matmul(p_dense, x_pad, tm=tm, tn=tn, tk=tk)
    return out_pad[:n_coarse, :c]


class ConvBlock2:
    """JAX/Pallas equivalent of _ConvBlock2 (stateless: only CustomPoolingAdd)."""

    def __init__(self, in_channels, out_channels, gnn_data=None):
        del in_channels, out_channels, gnn_data  # no parameters in _ConvBlock2
        self._p_cache = None  # padded dense pooling operator, built once

    def __call__(self, x, graph_data, graph_pool_data, pool_data_forward):
        del graph_data  # unused by _ConvBlock2.forward
        edge_index, edge_attr = graph_pool_data
        n_fine, c = x.shape
        n_coarse = pool_data_forward.shape[0]
        if self._p_cache is None:
            tm, tk, _ = _pick_tiles(n_coarse, n_fine, c)
            self._p_cache = build_pool_operator(edge_index, edge_attr, n_coarse,
                                                n_fine, x.dtype, tm, tk)
        return custom_pooling_add(x, edge_index, edge_attr, pool_data_forward,
                                  p_dense=self._p_cache)


def _reference_pool_add(x, edge_index, edge_attr, pool_data_forward):
    """Pure-JAX reference (per-edge weighted scatter-add)."""
    n_coarse = pool_data_forward.shape[0]
    src, dst = edge_index
    w = edge_attr.reshape(-1)
    return jnp.zeros((n_coarse, x.shape[1]), x.dtype).at[dst].add(w[:, None] * x[src])


if __name__ == "__main__":
    key = jax.random.PRNGKey(0)
    k_x, k_dst, k_w, k_meta = jax.random.split(key, 4)

    N_FINE = 64     # fine-graph nodes (input)
    N_COARSE = 16   # coarse-graph nodes (output)
    C = 32          # feature channels
    K = 3           # pooling edges per fine node -> E = 192 edges

    x = jax.random.normal(k_x, (N_FINE, C), dtype=jnp.float32)

    # Pooling edges: each fine node contributes to K random coarse nodes.
    src = jnp.repeat(jnp.arange(N_FINE, dtype=jnp.int32), K)
    dst = jax.random.randint(k_dst, (N_FINE * K,), 0, N_COARSE, dtype=jnp.int32)
    edge_index = jnp.stack([src, dst], axis=0)
    edge_attr = jax.random.uniform(k_w, (N_FINE * K, 1), dtype=jnp.float32) + 0.1

    # poolDataForward: coarse-side metadata from the pooling pass (only its
    # length, N_coarse, is needed here).
    pool_data_forward = jax.random.randint(k_meta, (N_COARSE,), 0, N_FINE, dtype=jnp.int32)

    block = ConvBlock2(in_channels=C, out_channels=C, gnn_data=None)
    out = block(x, graph_data=None, graph_pool_data=(edge_index, edge_attr),
                pool_data_forward=pool_data_forward)
    out = jax.block_until_ready(out)

    # Second call reuses the cached (hoisted) operator; must match.
    out2 = jax.block_until_ready(
        block(x, None, (edge_index, edge_attr), pool_data_forward))

    ref = _reference_pool_add(x, edge_index, edge_attr, pool_data_forward)
    np.testing.assert_allclose(np.asarray(out), np.asarray(ref), rtol=1e-4, atol=1e-4)
    np.testing.assert_allclose(np.asarray(out2), np.asarray(out), rtol=0, atol=0)

    assert out.shape == (N_COARSE, C)
    print("KERNEL_OK")
</pallas_src>

<mosaic_0001>
module attributes {stable_mosaic.version = 11 : i64} {
  func.func @_pool_matmul_kernel(%arg0: i32, %arg1: i32, %arg2: i32, %arg3: memref<16x128xf32, #tpu.memory_space<vmem>>, %arg4: memref<128x128xf32, #tpu.memory_space<vmem>>, %arg5: memref<16x128xf32, #tpu.memory_space<vmem>>, %arg6: memref<16x128xf32, #tpu.memory_space<vmem>>) attributes {dimension_semantics = [#tpu.dimension_semantics<parallel>, #tpu.dimension_semantics<parallel>, #tpu.dimension_semantics<arbitrary>], iteration_bounds = array<i64: 1, 1, 1>, scalar_prefetch = 0 : i64, scratch_operands = 1 : i64, tpu.core_type = #tpu.core_type<tc>, window_params = [{transform_indices = @transform_0, window_bounds = array<i64: 16, 128>}, {transform_indices = @transform_1, window_bounds = array<i64: 128, 128>}, {transform_indices = @transform_2, window_bounds = array<i64: 16, 128>}]} {
    %c0_i32 = arith.constant 0 : i32
    %0 = arith.cmpi eq, %arg2, %c0_i32 : i32
    %1 = arith.extui %0 : i1 to i32
    %c0_i32_0 = arith.constant 0 : i32
    %2 = arith.cmpi ne, %1, %c0_i32_0 : i32
    scf.if %2 {
      %cst_10 = arith.constant 0.000000e+00 : f32
      %12 = vector.broadcast %cst_10 : f32 to vector<16x128xf32>
      %c0_11 = arith.constant 0 : index
      %c0_12 = arith.constant 0 : index
      %13 = vector.load %arg6[%c0_11, %c0_12] : memref<16x128xf32, #tpu.memory_space<vmem>>, vector<16x128xf32>
      tpu.vector_store %arg6[%c0_11, %c0_12], %12 {strides = array<i32>} : memref<16x128xf32, #tpu.memory_space<vmem>>, vector<16x128xf32>,
    } else {
    }
    %c0 = arith.constant 0 : index
    %c0_1 = arith.constant 0 : index
    %3 = vector.load %arg6[%c0, %c0_1] : memref<16x128xf32, #tpu.memory_space<vmem>>, vector<16x128xf32>
    %c0_2 = arith.constant 0 : index
    %c0_3 = arith.constant 0 : index
    %4 = vector.load %arg3[%c0_2, %c0_3] : memref<16x128xf32, #tpu.memory_space<vmem>>, vector<16x128xf32>
    %c0_4 = arith.constant 0 : index
    %c0_5 = arith.constant 0 : index
    %5 = vector.load %arg4[%c0_4, %c0_5] : memref<128x128xf32, #tpu.memory_space<vmem>>, vector<128x128xf32>
    %cst = arith.constant dense<0.000000e+00> : vector<16x128xf32>
    %6 = tpu.matmul %4, %5, %cst {dimension_numbers = #tpu.dot_dimension_numbers<[1], [0], [0], [1], [0, 0, 1, 1], [], []>} : vector<16x128xf32>, vector<128x128xf32>, vector<16x128xf32> -> vector<16x128xf32>
    %7 = arith.addf %3, %6 : vector<16x128xf32>
    %c0_6 = arith.constant 0 : index
    %c0_7 = arith.constant 0 : index
    %8 = vector.load %arg6[%c0_6, %c0_7] : memref<16x128xf32, #tpu.memory_space<vmem>>, vector<16x128xf32>
    tpu.vector_store %arg6[%c0_6, %c0_7], %7 {strides = array<i32>} : memref<16x128xf32, #tpu.memory_space<vmem>>, vector<16x128xf32>,
    %c0_i32_8 = arith.constant 0 : i32
    %9 = arith.cmpi eq, %arg2, %c0_i32_8 : i32
    %10 = arith.extui %9 : i1 to i32
    %c0_i32_9 = arith.constant 0 : i32
    %11 = arith.cmpi ne, %10, %c0_i32_9 : i32
    scf.if %11 {
      %c0_10 = arith.constant 0 : index
      %c0_11 = arith.constant 0 : index
      %12 = vector.load %arg6[%c0_10, %c0_11] : memref<16x128xf32, #tpu.memory_space<vmem>>, vector<16x128xf32>
      %c0_12 = arith.constant 0 : index
      %c0_13 = arith.constant 0 : index
      %13 = vector.load %arg5[%c0_12, %c0_13] : memref<16x128xf32, #tpu.memory_space<vmem>>, vector<16x128xf32>
      tpu.vector_store %arg5[%c0_12, %c0_13], %12 {strides = array<i32>} : memref<16x128xf32, #tpu.memory_space<vmem>>, vector<16x128xf32>,
    } else {
    }
    return
  }
  func.func @transform_0(%arg0: i32, %arg1: i32, %arg2: i32) -> (i32, i32) {
    %c0_i32 = arith.constant 0 : i32
    return %arg0, %arg2 : i32, i32
  }
  func.func @transform_1(%arg0: i32, %arg1: i32, %arg2: i32) -> (i32, i32) {
    %c0_i32 = arith.constant 0 : i32
    return %arg2, %arg1 : i32, i32
  }
  func.func @transform_2(%arg0: i32, %arg1: i32, %arg2: i32) -> (i32, i32) {
    %c0_i32 = arith.constant 0 : i32
    return %arg0, %arg1 : i32, i32
  }
}

</mosaic_0001>

<llo_original>
// kernel: _pool_matmul.1
$region0: #{_pool_matmul.1}
  #allocation0 [shape = 'u32[]', space=smem, size = 0x4, offset = 0x4, fixed_abs, tag = 'smem constant byte address 0x4 - core index']
  #allocation1 [shape = 'u32[144,128]{1,0:T(1,128)}', space=vmem, size = 0x12000, scoped, tag = 'internal scratch']
  #allocation2 [shape = 'f32[16,128]{1,0:T(8,128)}', space=vmem, size = 0x2000, scoped, tag = 'scratch operand']
  %s0 = inlined_call_operand.hbm [shape: f32[16,128], index: 0, kind: input, shape index: {}]
  %s1 = inlined_call_operand.hbm [shape: f32[128,128], index: 1, kind: input, shape index: {}]
  %s2 = inlined_call_operand.hbm [shape: f32[16,128], index: 2, kind: output, shape index: {}]
  %s3 = sld [smem:[#allocation0]]
  $region34: #{_pool_matmul.1} parent=0
    _
  %s5 = ssub.s32 1, %s3
  %s6 = scalar_select 0, %s5, %s3
  $region1: #{_pool_matmul.1} parent=0
    #allocation3 [shape = 'u8[8192]{0}', space=vmem, size = 0x2000, scoped, tag = 'input window, operand 0, single buffered']
    #allocation4 [shape = 's32[1]{0}', space=sflag, size = 0x4, scoped, tag = 'scoped memory for _pool_matmul.1']
    #allocation5 [shape = 's32[1]{0}', space=sflag, size = 0x4, scoped, tag = 'scoped memory for _pool_matmul.1']
    #allocation6 [shape = 'u8[65536]{0}', space=vmem, size = 0x10000, scoped, tag = 'input window, operand 1, single buffered']
    #allocation7 [shape = 's32[1]{0}', space=sflag, size = 0x4, scoped, tag = 'scoped memory for _pool_matmul.1']
    #allocation8 [shape = 'u8[8192]{0}', space=vmem, size = 0x2000, scoped, tag = 'output window, operand 0, single buffered']
    %7 = vsyncpa [#allocation4], 0
    %8 = vsyncpa [#allocation7], 0
    %9 = vsyncpa [#allocation5], 0
    // Predicated region
    $region2: #{_pool_matmul.1} parent=1 // pred_check
      _
    $region3: #{_pool_matmul.1} parent=1 // pred_check_branch
      %11 = sbr.rel (0) target = $region5
    $region4: #{_pool_matmul.1} parent=1 // pred_region
      %s13 = ssub.s32 256, 256
      %14 = vsyncadd [#allocation4], %s13
      %s15 = sshll.u32 [#allocation3], 4
      %s16 = int_to_ptr.vmem [resolvable:$true] %s15
      %21 = dma.hbm_to_vmem [thread:$0]  %s0, 256, %s16, [#allocation4], 128, 128, 8
    $region5: #{_pool_matmul.1} parent=1 // pred_fallthru
      _
    // Predicated region
    $region6: #{_pool_matmul.1} parent=1 // pred_check
      _
    $region7: #{_pool_matmul.1} parent=1 // pred_check_branch
      %23 = sbr.rel (0) target = $region9
    $region8: #{_pool_matmul.1} parent=1 // pred_region
      %s25 = ssub.s32 2048, 2048
      %26 = vsyncadd [#allocation7], %s25
      %s27 = sshll.u32 [#allocation6], 4
      %s28 = int_to_ptr.vmem [resolvable:$true] %s27
      %33 = dma.hbm_to_vmem [thread:$0]  %s1, 2048, %s28, [#allocation7], 128, 128, 8
    $region9: #{_pool_matmul.1} parent=1 // pred_fallthru
      _
    // Predicated region
    $region10: #{_pool_matmul.1} parent=1 // pred_check
      _
    $region11: #{_pool_matmul.1} parent=1 // pred_check_branch
      %35 = sbr.rel (0) target = $region13
    $region12: #{_pool_matmul.1} parent=1 // pred_region
      %36 = dma.done [#allocation4], 256
    $region13: #{_pool_matmul.1} parent=1 // pred_fallthru
      _
    // Predicated region
    $region14: #{_pool_matmul.1} parent=1 // pred_check
      _
    $region15: #{_pool_matmul.1} parent=1 // pred_check_branch
      %38 = sbr.rel (0) target = $region17
    $region16: #{_pool_matmul.1} parent=1 // pred_region
      %39 = dma.done [#allocation7], 2048
    $region17: #{_pool_matmul.1} parent=1 // pred_fallthru
      _
    %p40 = scmp.eq.s32.totalorder 0, 0
    // Predicated region
    $region18: #{_pool_matmul.1} parent=1 // pred_check
      %p41 = pneg %p40
    $region19: #{_pool_matmul.1} parent=1 // pred_check_branch
      %43 = sbr.rel (%p41) target = $region21
    $region20: #{_pool_matmul.1} parent=1 // pred_region
      %44 = vst [vmem:[#allocation2] sm:$0xff] 0.0
      %45 = vst [vmem:[#allocation2 + $0x8] sm:$0xff] 0.0
    $region21: #{_pool_matmul.1} parent=1 // pred_fallthru
      _
    %v46 = vld [vmem:[#allocation2] sm:$0xff]
    %v47 = vld [vmem:[#allocation2 + $0x8] sm:$0xff]
    %v48 = vld [vmem:[#allocation3] sm:$0xff]
    %v49 = vld [vmem:[#allocation3 + $0x8] sm:$0xff]
    %v50 = vld [vmem:[#allocation6] sm:$0xff]
    %v51 = vld [vmem:[#allocation6 + $0x8] sm:$0xff]
    %v52 = vld [vmem:[#allocation6 + $0x10] sm:$0xff]
    %v53 = vld [vmem:[#allocation6 + $0x18] sm:$0xff]
    %v54 = vld [vmem:[#allocation6 + $0x20] sm:$0xff]
    %v55 = vld [vmem:[#allocation6 + $0x28] sm:$0xff]
    %v56 = vld [vmem:[#allocation6 + $0x30] sm:$0xff]
    %v57 = vld [vmem:[#allocation6 + $0x38] sm:$0xff]
    %v58 = vld [vmem:[#allocation6 + $0x40] sm:$0xff]
    %v59 = vld [vmem:[#allocation6 + $0x48] sm:$0xff]
    %v60 = vld [vmem:[#allocation6 + $0x50] sm:$0xff]
    %v61 = vld [vmem:[#allocation6 + $0x58] sm:$0xff]
    %v62 = vld [vmem:[#allocation6 + $0x60] sm:$0xff]
    %v63 = vld [vmem:[#allocation6 + $0x68] sm:$0xff]
    %v64 = vld [vmem:[#allocation6 + $0x70] sm:$0xff]
    %v65 = vld [vmem:[#allocation6 + $0x78] sm:$0xff]
    %66 = vmatprep.subr.mxu0 0.0
    %67 = vmatpush1.msra.mxu0 %v65
    %68 = vmatprep.subr.mxu0 0.0
    %69 = vmatpush1.msra.mxu0 %v64
    %70 = vmatprep.subr.mxu0 0.0
    %71 = vmatpush1.msra.mxu0 %v63
    %72 = vmatprep.subr.mxu0 0.0
    %73 = vmatpush1.msra.mxu0 %v62
    %74 = vmatprep.subr.mxu0 0.0
    %75 = vmatpush1.msra.mxu0 %v61
    %76 = vmatprep.subr.mxu0 0.0
    %77 = vmatpush1.msra.mxu0 %v60
    %78 = vmatprep.subr.mxu0 0.0
    %79 = vmatpush1.msra.mxu0 %v59
    %80 = vmatprep.subr.mxu0 0.0
    %81 = vmatpush1.msra.mxu0 %v58
    %82 = vmatprep.subr.mxu0 0.0
    %83 = vmatpush1.msra.mxu0 %v57
    %84 = vmatprep.subr.mxu0 0.0
    %85 = vmatpush1.msra.mxu0 %v56
    %86 = vmatprep.subr.mxu0 0.0
    %87 = vmatpush1.msra.mxu0 %v55
    %88 = vmatprep.subr.mxu0 0.0
    %89 = vmatpush1.msra.mxu0 %v54
    %90 = vmatprep.subr.mxu0 0.0
    %91 = vmatpush1.msra.mxu0 %v53
    %92 = vmatprep.subr.mxu0 0.0
    %93 = vmatpush1.msra.mxu0 %v52
    %94 = vmatprep.subr.mxu0 0.0
    %95 = vmatpush1.msra.mxu0 %v51
    %96 = vmatprep.subr.mxu0 0.0
    %97 = vmatpush1.msra.mxu0 %v50
    %98 = vmatprep.subr.mxu0 0.0
    %99 = vmatpush2.msra.mxu0 0.0
    %100 = vmatprep.subr.mxu0 0.0
    %101 = vmatpush2.msra.mxu0 0.0
    %102 = vmatprep.subr.mxu0 0.0
    %103 = vmatpush2.msra.mxu0 0.0
    %104 = vmatprep.subr.mxu0 0.0
    %105 = vmatpush2.msra.mxu0 0.0
    %106 = vmatprep.subr.mxu0 0.0
    %107 = vmatpush2.msra.mxu0 0.0
    %108 = vmatprep.subr.mxu0 0.0
    %109 = vmatpush2.msra.mxu0 0.0
    %110 = vmatprep.subr.mxu0 0.0
    %111 = vmatpush2.msra.mxu0 0.0
    %112 = vmatprep.subr.mxu0 0.0
    %113 = vmatpush2.msra.mxu0 0.0
    %114 = vmatprep.subr.mxu0 0.0
    %115 = vmatpush2.msra.mxu0 0.0
    %116 = vmatprep.subr.mxu0 0.0
    %117 = vmatpush2.msra.mxu0 0.0
    %118 = vmatprep.subr.mxu0 0.0
    %119 = vmatpush2.msra.mxu0 0.0
    %120 = vmatprep.subr.mxu0 0.0
    %121 = vmatpush2.msra.mxu0 0.0
    %122 = vmatprep.subr.mxu0 0.0
    %123 = vmatpush2.msra.mxu0 0.0
    %124 = vmatprep.subr.mxu0 0.0
    %125 = vmatpush2.msra.mxu0 0.0
    %126 = vmatprep.subr.mxu0 0.0
    %127 = vmatpush2.msra.mxu0 0.0
    %128 = vmatprep.subr.mxu0 0.0
    %129 = vmatpush2.msra.mxu0 0.0
    %130 = vmatprep.mubr.f32.mxu0 0.0
    %131 = vmatmul.mubr.f32.gmra.mxu0 %v48
    %v132 = vpop.f32.mrf.mxu0
    %v133 = vadd.f32 0.0, %v132
    %v134 = vpop.f32.mrf.mxu0
    %135 = vmatprep.mubr.f32.mxu0 0.0
    %136 = vmatmul.mubr.f32.gmra.mxu0 %v49
    %v137 = vpop.f32.mrf.mxu0
    %v138 = vadd.f32 0.0, %v137
    %v139 = vpop.f32.mrf.mxu0
    %140 = vdwg.mxu0
    %v141 = vadd.f32 %v46, %v133
    %v142 = vadd.f32 %v47, %v138
    %143 = vst [vmem:[#allocation2] sm:$0xff] %v141
    %144 = vst [vmem:[#allocation2 + $0x8] sm:$0xff] %v142
    // Predicated region
    $region22: #{_pool_matmul.1} parent=1 // pred_check
      %p145 = pneg %p40
    $region23: #{_pool_matmul.1} parent=1 // pred_check_branch
      %147 = sbr.rel (%p145) target = $region25
    $region24: #{_pool_matmul.1} parent=1 // pred_region
      %v148 = vld [vmem:[#allocation2] sm:$0xff]
      %v149 = vld [vmem:[#allocation2 + $0x8] sm:$0xff]
      %150 = vst [vmem:[#allocation8] sm:$0xff] %v148
      %151 = vst [vmem:[#allocation8 + $0x8] sm:$0xff] %v149
    $region25: #{_pool_matmul.1} parent=1 // pred_fallthru
      _
    // Predicated region
    $region26: #{_pool_matmul.1} parent=1 // pred_check
      _
    $region27: #{_pool_matmul.1} parent=1 // pred_check_branch
      %153 = sbr.rel (0) target = $region29
    $region28: #{_pool_matmul.1} parent=1 // pred_region
      %s155 = ssub.s32 256, 256
      %156 = vsyncadd [#allocation5], %s155
      %s157 = sshll.u32 [#allocation8], 4
      %s158 = int_to_ptr.vmem [resolvable:$true] %s157
      %163 = dma.vmem_to_hbm [thread:$0]  %s158, 256, %s2, [#allocation5], 128, 128, 8
    $region29: #{_pool_matmul.1} parent=1 // pred_fallthru
      _
    // Predicated region
    $region30: #{_pool_matmul.1} parent=1 // pred_check
      _
    $region31: #{_pool_matmul.1} parent=1 // pred_check_branch
      %165 = sbr.rel (0) target = $region33
    $region32: #{_pool_matmul.1} parent=1 // pred_region
      %166 = dma.done [#allocation5], 256
    $region33: #{_pool_matmul.1} parent=1 // pred_fallthru
      _
    %167 = vsyncpa [#allocation4], 1
    %168 = vsyncpa [#allocation7], 1
    %169 = vsyncpa [#allocation5], 1

</llo_original>
